<compile_context>
chip_gen: v7x
topology: tpu7x:2x2x1
jax: 0.10.0
libtpu: 0.0.40
codegen_flags: <defaults>
</compile_context>

<pallas_src>
import functools

import jax
import jax.numpy as jnp
from jax.experimental import pallas as pl
from jax.experimental.pallas import tpu as pltpu

_MiB = 1024 * 1024


def _pes_kernel(x_ref, w_ind_ref, w_pool_ref, b_ref, o_ref, *, n_set: int, inv_n: float):
    """One grid step: a slab of Bt whole batch elements (Bt * n_set rows).

    x_ref      : (TM, D_in)     TM = Bt * n_set, native dtype (bf16/f32)
    w_ind_ref  : (D_in, D_out)  = W_ind^T   (native dtype -> MXU)
    w_pool_ref : (D_in, D_out)  = W_pool^T  (f32; only used by the tiny matmul)
    b_ref      : (1, D_out)     f32
    o_ref      : (TM, D_out)
    """
    tm, d_in = x_ref.shape
    d_out = o_ref.shape[-1]
    bt = tm // n_set

    x = x_ref[...]

    # ---- pooling branch: reduce the set axis FIRST (f32 accumulation), then a tiny
    # (Bt, D_in) x (D_in, D_out) matmul.  (TM, D_in) -> (Bt, N, D_in) is a free
    # leading-dim split because n_set % 8 == 0.
    x_sum = jnp.sum(x.reshape(bt, n_set, d_in), axis=1, dtype=jnp.float32)    # (Bt, D_in)
    x_mean = x_sum * inv_n                                                    # true-N mean
    pooled = jnp.dot(x_mean, w_pool_ref[...], preferred_element_type=jnp.float32)  # (Bt, D_out)
    t = pooled + b_ref[...]                                                   # bias folded in

    # ---- individual branch: one big MXU matmul over all rows of the slab.
    ind = jnp.dot(x, w_ind_ref[...], preferred_element_type=jnp.float32)      # (TM, D_out)

    out = ind.reshape(bt, n_set, d_out) + t[:, None, :]                       # broadcast over N
    # TODO(synk): lane-dense (Bt, N*D_out) store for D_out < 128 (needs in-kernel
    # minor-dim merge / relayout) intentionally not done here.
    o_ref[...] = out.reshape(tm, d_out).astype(o_ref.dtype)


def _vmem_working_budget_bytes() -> int:
    """Per-step pipelined working-set budget, generation aware."""
    budget = 10 * _MiB                      # fits v5e's 16 MiB scoped-VMEM default
    try:                                    # shrink on chips with less VMEM (v7x: 64 MiB/TC)
        cap = getattr(pltpu.get_tpu_info(), "vmem_capacity_bytes", 0) or 0
        if cap:
            budget = min(budget, max(2 * _MiB, cap // 8))
    except Exception:
        pass
    return int(budget)


def _choose_batch_tile(B: int, n_set: int, d_in: int, d_out: int,
                       x_itemsize: int, budget_bytes: int) -> int:
    """Largest divisor-of-B batch tile that (a) fits the byte budget and (b) keeps
    >= 2 (ideally >= 4) grid steps for megacore sharding + DMA/compute overlap."""
    # Per-row footprint: 2x-buffered x block + 2x-buffered out block + f32 temps.
    per_row = 2 * d_in * x_itemsize + 2 * d_out * x_itemsize + 2 * d_out * 4
    weights = 2 * d_in * d_out * (x_itemsize + 4) + 2 * d_out * 4
    avail = max(budget_bytes - weights, per_row * n_set)   # always allow >= 1 batch element
    bt_bytes = max(1, avail // (per_row * n_set))
    if B >= 4:
        bt_steps = B // 4
    elif B >= 2:
        bt_steps = B // 2
    else:
        bt_steps = 1
    target = int(min(bt_bytes, bt_steps, B))
    best = 1
    for bt in range(1, target + 1):
        if B % bt == 0:
            best = bt
    return best


def pes_symetry_mean(x, w_individual, b_individual, w_pooling, *, pos=False):
    """x: (B, N, D_in); w_*: (D_out, D_in) torch convention; b_individual: (D_out,)."""
    if pos:
        # torch parametrization glue: softplus on the weights (wrapper-side, elementwise).
        w_individual = jax.nn.softplus(w_individual)
        w_pooling = jax.nn.softplus(w_pooling)

    B, N, D_in = x.shape
    D_out = w_individual.shape[0]

    # Pad the set axis to a sublane multiple: zero rows contribute nothing to the sum
    # and 1/N uses the true N, so the mean is exact; padded output rows are dropped.
    n_pad = -(-N // 8) * 8
    if n_pad != N:
        x = jnp.pad(x, ((0, 0), (0, n_pad - N), (0, 0)))

    x_item = jnp.dtype(x.dtype).itemsize
    w_ind_t = jnp.asarray(w_individual).T.astype(x.dtype)        # (D_in, D_out), MXU-native dtype
    w_pool_t = jnp.asarray(w_pooling).T.astype(jnp.float32)      # (D_in, D_out), f32 tiny matmul
    bias = jnp.asarray(b_individual).reshape(1, D_out).astype(jnp.float32)

    bt = _choose_batch_tile(B, n_pad, D_in, D_out, x_item, _vmem_working_budget_bytes())
    tm = bt * n_pad
    x2 = x.reshape(B * n_pad, D_in)                              # free row-major reshape

    # VMEM estimate: 2x-buffered x/out/weight/bias blocks + f32 temps.  Only raise the
    # scoped limit when needed; cap at 64 MiB so the request is legal on v7x.
    est = (2 * tm * (D_in + D_out) * x_item
           + 2 * D_in * D_out * (x_item + 4) + 2 * D_out * 4
           + 2 * tm * D_out * 4
           + bt * (D_in + 2 * D_out) * 4)
    ckw = {}
    if est > 14 * _MiB:
        ckw["vmem_limit_bytes"] = int(min(64 * _MiB, max(32 * _MiB, est * 3 // 2)))

    out2 = pl.pallas_call(
        functools.partial(_pes_kernel, n_set=n_pad, inv_n=1.0 / N),
        out_shape=jax.ShapeDtypeStruct((B * n_pad, D_out), x.dtype),
        grid_spec=pltpu.PrefetchScalarGridSpec(
            num_scalar_prefetch=0,
            grid=(B // bt,),
            in_specs=[
                pl.BlockSpec((tm, D_in), lambda i: (i, 0)),
                pl.BlockSpec((D_in, D_out), lambda i: (0, 0)),
                pl.BlockSpec((D_in, D_out), lambda i: (0, 0)),
                pl.BlockSpec((1, D_out), lambda i: (0, 0)),
            ],
            out_specs=pl.BlockSpec((tm, D_out), lambda i: (i, 0)),
        ),
        compiler_params=pltpu.CompilerParams(
            dimension_semantics=("parallel",), **ckw),
    )(x2, w_ind_t, w_pool_t, bias)

    out = out2.reshape(B, n_pad, D_out)
    if n_pad != N:
        out = out[:, :N, :]
    return out


def _reference(x, w_individual, b_individual, w_pooling, *, pos=False):
    if pos:
        w_individual = jax.nn.softplus(w_individual)
        w_pooling = jax.nn.softplus(w_pooling)
    x = x.astype(jnp.float32)
    x_mean = jnp.mean(x, axis=-2, keepdims=True)
    pooled = x_mean @ w_pooling.T
    ind = x @ w_individual.T + b_individual
    return ind + pooled


if __name__ == "__main__":
    key = jax.random.PRNGKey(0)
    kx, kw1, kb1, kw2 = jax.random.split(key, 4)

    B, N, D_in, D_out = 2, 8, 32, 32
    x = jax.random.normal(kx, (B, N, D_in), dtype=jnp.float32)

    # deterministic init matching nn.Linear's U(-1/sqrt(in), 1/sqrt(in)) shapes
    bound = 1.0 / jnp.sqrt(jnp.float32(D_in))
    w_individual = jax.random.uniform(kw1, (D_out, D_in), jnp.float32, -bound, bound)
    b_individual = jax.random.uniform(kb1, (D_out,), jnp.float32, -bound, bound)
    w_pooling = jax.random.uniform(kw2, (D_out, D_in), jnp.float32, -bound, bound)

    out = jax.block_until_ready(
        pes_symetry_mean(x, w_individual, b_individual, w_pooling, pos=False))
    ref = _reference(x, w_individual, b_individual, w_pooling, pos=False)
    assert out.shape == (B, N, D_out)
    assert jnp.allclose(out, ref, atol=1e-4, rtol=1e-4), "mismatch vs reference"

    # pos=True (softplus-parametrized weights) path
    out_pos = jax.block_until_ready(
        pes_symetry_mean(x, w_individual, b_individual, w_pooling, pos=True))
    ref_pos = _reference(x, w_individual, b_individual, w_pooling, pos=True)
    assert jnp.allclose(out_pos, ref_pos, atol=1e-4, rtol=1e-4), "mismatch (pos)"

    # larger batch -> multi-step parallel grid (byte-budget tiling, >=4 grid steps)
    B2 = 128
    x_big = jax.random.normal(kx, (B2, N, D_in), dtype=jnp.float32)
    out_big = jax.block_until_ready(
        pes_symetry_mean(x_big, w_individual, b_individual, w_pooling))
    ref_big = _reference(x_big, w_individual, b_individual, w_pooling)
    assert jnp.allclose(out_big, ref_big, atol=1e-4, rtol=1e-4), "mismatch (big)"

    # set size not a multiple of 8 -> zero-padded set axis, true-N mean
    B3, N3, Di3, Do3 = 4, 5, 16, 24
    x_odd = jax.random.normal(kx, (B3, N3, Di3), dtype=jnp.float32)
    w1o = jax.random.uniform(kw1, (Do3, Di3), jnp.float32, -0.3, 0.3)
    b1o = jax.random.uniform(kb1, (Do3,), jnp.float32, -0.3, 0.3)
    w2o = jax.random.uniform(kw2, (Do3, Di3), jnp.float32, -0.3, 0.3)
    out_odd = jax.block_until_ready(pes_symetry_mean(x_odd, w1o, b1o, w2o))
    ref_odd = _reference(x_odd, w1o, b1o, w2o)
    assert out_odd.shape == (B3, N3, Do3)
    assert jnp.allclose(out_odd, ref_odd, atol=1e-4, rtol=1e-4), "mismatch (odd N)"

    print("KERNEL_OK")
</pallas_src>

<mosaic_0001>
module attributes {stable_mosaic.version = 11 : i64} {
  func.func @_pes_kernel(%arg0: i32, %arg1: memref<8x32xf32, #tpu.memory_space<vmem>>, %arg2: memref<32x32xf32, #tpu.memory_space<vmem>>, %arg3: memref<32x32xf32, #tpu.memory_space<vmem>>, %arg4: memref<1x32xf32, #tpu.memory_space<vmem>>, %arg5: memref<8x32xf32, #tpu.memory_space<vmem>>) attributes {dimension_semantics = [#tpu.dimension_semantics<parallel>], iteration_bounds = array<i64: 2>, scalar_prefetch = 0 : i64, scratch_operands = 0 : i64, tpu.core_type = #tpu.core_type<tc>, window_params = [{transform_indices = @transform_0, window_bounds = array<i64: 8, 32>}, {pipeline_mode = #tpu.pipeline_mode<synchronous>, transform_indices = @transform_1, window_bounds = array<i64: 32, 32>}, {pipeline_mode = #tpu.pipeline_mode<synchronous>, transform_indices = @transform_2, window_bounds = array<i64: 32, 32>}, {pipeline_mode = #tpu.pipeline_mode<synchronous>, transform_indices = @transform_3, window_bounds = array<i64: 1, 32>}, {transform_indices = @transform_4, window_bounds = array<i64: 8, 32>}]} {
    %c0 = arith.constant 0 : index
    %c0_0 = arith.constant 0 : index
    %0 = vector.load %arg1[%c0, %c0_0] : memref<8x32xf32, #tpu.memory_space<vmem>>, vector<8x32xf32>
    %1 = vector.shape_cast %0 : vector<8x32xf32> to vector<1x8x32xf32>
    %cst = arith.constant dense<0.000000e+00> : vector<1x32xf32>
    %2 = vector.multi_reduction <add>, %1, %cst [1] : vector<1x8x32xf32> to vector<1x32xf32>
    %cst_1 = arith.constant 1.250000e-01 : f32
    %3 = vector.broadcast %cst_1 : f32 to vector<1x32xf32>
    %4 = arith.mulf %2, %3 : vector<1x32xf32>
    %c0_2 = arith.constant 0 : index
    %c0_3 = arith.constant 0 : index
    %5 = vector.load %arg3[%c0_2, %c0_3] : memref<32x32xf32, #tpu.memory_space<vmem>>, vector<32x32xf32>
    %cst_4 = arith.constant dense<0.000000e+00> : vector<1x32xf32>
    %6 = tpu.matmul %4, %5, %cst_4 {dimension_numbers = #tpu.dot_dimension_numbers<[1], [0], [0], [1], [0, 0, 1, 1], [], []>} : vector<1x32xf32>, vector<32x32xf32>, vector<1x32xf32> -> vector<1x32xf32>
    %c0_5 = arith.constant 0 : index
    %c0_6 = arith.constant 0 : index
    %7 = vector.load %arg4[%c0_5, %c0_6] : memref<1x32xf32, #tpu.memory_space<vmem>>, vector<1x32xf32>
    %8 = arith.addf %6, %7 : vector<1x32xf32>
    %c0_7 = arith.constant 0 : index
    %c0_8 = arith.constant 0 : index
    %9 = vector.load %arg2[%c0_7, %c0_8] : memref<32x32xf32, #tpu.memory_space<vmem>>, vector<32x32xf32>
    %cst_9 = arith.constant dense<0.000000e+00> : vector<8x32xf32>
    %10 = tpu.matmul %0, %9, %cst_9 {dimension_numbers = #tpu.dot_dimension_numbers<[1], [0], [0], [1], [0, 0, 1, 1], [], []>} : vector<8x32xf32>, vector<32x32xf32>, vector<8x32xf32> -> vector<8x32xf32>
    %11 = vector.shape_cast %10 : vector<8x32xf32> to vector<1x8x32xf32>
    %12 = vector.shape_cast %8 : vector<1x32xf32> to vector<1x1x32xf32>
    %13 = vector.broadcast %12 : vector<1x1x32xf32> to vector<1x8x32xf32>
    %14 = arith.addf %11, %13 : vector<1x8x32xf32>
    %15 = vector.shape_cast %14 : vector<1x8x32xf32> to vector<8x32xf32>
    %c0_10 = arith.constant 0 : index
    %c0_11 = arith.constant 0 : index
    %16 = vector.load %arg5[%c0_10, %c0_11] : memref<8x32xf32, #tpu.memory_space<vmem>>, vector<8x32xf32>
    tpu.vector_store %arg5[%c0_10, %c0_11], %15 {strides = array<i32>} : memref<8x32xf32, #tpu.memory_space<vmem>>, vector<8x32xf32>,
    return
  }
  func.func @transform_0(%arg0: i32) -> (i32, i32) {
    %c0_i32 = arith.constant 0 : i32
    %c0_i32_0 = arith.constant 0 : i32
    return %arg0, %c0_i32 : i32, i32
  }
  func.func @transform_1(%arg0: i32) -> (i32, i32) {
    %c0_i32 = arith.constant 0 : i32
    %c0_i32_0 = arith.constant 0 : i32
    %c0_i32_1 = arith.constant 0 : i32
    return %c0_i32, %c0_i32_0 : i32, i32
  }
  func.func @transform_2(%arg0: i32) -> (i32, i32) {
    %c0_i32 = arith.constant 0 : i32
    %c0_i32_0 = arith.constant 0 : i32
    %c0_i32_1 = arith.constant 0 : i32
    return %c0_i32, %c0_i32_0 : i32, i32
  }
  func.func @transform_3(%arg0: i32) -> (i32, i32) {
    %c0_i32 = arith.constant 0 : i32
    %c0_i32_0 = arith.constant 0 : i32
    %c0_i32_1 = arith.constant 0 : i32
    return %c0_i32, %c0_i32_0 : i32, i32
  }
  func.func @transform_4(%arg0: i32) -> (i32, i32) {
    %c0_i32 = arith.constant 0 : i32
    %c0_i32_0 = arith.constant 0 : i32
    return %arg0, %c0_i32 : i32, i32
  }
}

</mosaic_0001>

<llo_original>
// kernel: tpu_custom_call.1
$region0: #{tpu_custom_call.1}
  #allocation0 [shape = 'u32[]', space=smem, size = 0x4, offset = 0x4, fixed_abs, tag = 'smem constant byte address 0x4 - core index']
  #allocation1 [shape = 'u32[144,128]{1,0:T(1,128)}', space=vmem, size = 0x12000, scoped, tag = 'internal scratch']
  %s0 = inlined_call_operand.hbm [shape: f32[16,32], index: 0, kind: input, shape index: {}]
  %s1 = inlined_call_operand.hbm [shape: f32[32,32], index: 1, kind: input, shape index: {}]
  %s2 = inlined_call_operand.hbm [shape: f32[32,32], index: 2, kind: input, shape index: {}]
  %s3 = inlined_call_operand.vmem [shape: f32[1,32], index: 3, kind: input, shape index: {}]
  %s4 = inlined_call_operand.hbm [shape: f32[16,32], index: 4, kind: output, shape index: {}]
  %s5 = sld [smem:[#allocation0]]
  $region61: #{tpu_custom_call.1} parent=0
    _
  %s7 = ssub.s32 1, %s5
  %s8 = scalar_select 0, %s7, %s5
  $region1: #{tpu_custom_call.1} parent=0
    #allocation2 [shape = 'u8[8192]{0}', space=vmem, size = 0x2000, scoped, tag = 'input window, operand 0']
    #allocation3 [shape = 's32[2]{0}', space=sflag, size = 0x8, scoped, tag = 'scoped memory for tpu_custom_call.1']
    #allocation4 [shape = 's32[2]{0}', space=sflag, size = 0x8, scoped, tag = 'scoped memory for tpu_custom_call.1']
    #allocation5 [shape = 'u8[16384]{0}', space=vmem, size = 0x4000, scoped, tag = 'input window, operand 1, single buffered']
    #allocation6 [shape = 's32[1]{0}', space=sflag, size = 0x4, scoped, tag = 'scoped memory for tpu_custom_call.1']
    #allocation7 [shape = 'u8[16384]{0}', space=vmem, size = 0x4000, scoped, tag = 'input window, operand 2, single buffered']
    #allocation8 [shape = 'u8[8192]{0}', space=vmem, size = 0x2000, scoped, tag = 'output window, operand 0']
    %9 = vsyncpa [#allocation3], 0
    %s10 = scalar_lea.sflag [#allocation3], 1
    %11 = vsyncpa %s10, 0
    %12 = vsyncpa [#allocation6], 0
    %13 = vsyncpa [#allocation4], 0
    %s14 = scalar_lea.sflag [#allocation4], 1
    %15 = vsyncpa %s14, 0
    loop: start=0, step=1, limit=4
    $region2: #{tpu_custom_call.1} parent=1 // loop_pre_header
      _
    $region3: #{tpu_custom_call.1} parent=1 // loop_header
      %s17 = sphi 0, %s21
      %p18 = scmp.ge.s32.totalorder %s17, 4
      %s27 = sphi 0, %s29
      %s30 = sphi 0, %s27
      %s31 = sphi 0, %s30
      %s47 = sphi 0, %s31
      %s51 = sphi 0, %s51
      %s53 = sphi 0, %s51
      %s54 = sphi 0, %s53
      %s68 = sphi 0, %s54
      %s72 = sphi 0, %s72
      %s74 = sphi 0, %s72
      %s75 = sphi 0, %s74
      %s89 = sphi 0, %s75
      %s93 = sphi 0, %s93
      %s95 = sphi 0, %s93
      %s96 = sphi 0, %s95
      %s110 = sphi 0, %s96
      %s116 = sphi 0, %s118
      %s119 = sphi 0, %s116
      %s120 = sphi 0, %s119
      %s136 = sphi 0, %s120
    $region4: #{tpu_custom_call.1} parent=1 // loop_header_branch
      %20 = sbr.rel (%p18) target = $region8
    $region5: #{tpu_custom_call.1} parent=1 // loop_body
      %s22 = ssub.s32 %s17, 1
      %s23 = ssub.s32 %s17, 2
      %s24 = sadd.s32 %s17, 1
      %s25 = ssub.s32 %s17, %s24
      %p26 = scmp.eq.s32.totalorder %s25, 0
      %s28 = sadd.s32 %s27, 1
      %s29 = scalar_select %p26, %s27, %s28
      %p32 = pneg %p26
      %p33 = scmp.eq.s32.totalorder %s17, 1
      %p34 = por %p32, %p33
      %p35 = scmp.ne.s32.totalorder %s27, %s30
      %p36 = scmp.eq.s32.totalorder %s17, 0
      %p37 = por %p35, %p36
      %p38 = scmp.ne.s32.totalorder %s27, %s30
      %p39 = scmp.eq.s32.totalorder %s22, 1
      %p40 = por %p38, %p39
      %p41 = scmp.ne.s32.totalorder %s30, %s31
      %p42 = scmp.eq.s32.totalorder %s22, 0
      %p43 = por %p41, %p42
      %p44 = scmp.ne.s32.totalorder %s30, %s31
      %p45 = scmp.eq.s32.totalorder %s23, 1
      %p46 = por %p44, %p45
      %p48 = scmp.ne.s32.totalorder %s31, %s47
      %p49 = scmp.eq.s32.totalorder %s23, 0
      %p50 = por %p48, %p49
      %s52 = sadd.s32 %s51, 1
      %p55 = scmp.eq.s32.totalorder %s17, 1
      %p56 = scmp.ne.s32.totalorder %s51, %s53
      %p57 = scmp.eq.s32.totalorder %s17, 0
      %p58 = por %p56, %p57
      %p59 = scmp.ne.s32.totalorder %s51, %s53
      %p60 = scmp.eq.s32.totalorder %s22, 1
      %p61 = por %p59, %p60
      %p62 = scmp.ne.s32.totalorder %s53, %s54
      %p63 = scmp.eq.s32.totalorder %s22, 0
      %p64 = por %p62, %p63
      %p65 = scmp.ne.s32.totalorder %s53, %s54
      %p66 = scmp.eq.s32.totalorder %s23, 1
      %p67 = por %p65, %p66
      %p69 = scmp.ne.s32.totalorder %s54, %s68
      %p70 = scmp.eq.s32.totalorder %s23, 0
      %p71 = por %p69, %p70
      %s73 = sadd.s32 %s72, 1
      %p76 = scmp.eq.s32.totalorder %s17, 1
      %p77 = scmp.ne.s32.totalorder %s72, %s74
      %p78 = scmp.eq.s32.totalorder %s17, 0
      %p79 = por %p77, %p78
      %p80 = scmp.ne.s32.totalorder %s72, %s74
      %p81 = scmp.eq.s32.totalorder %s22, 1
      %p82 = por %p80, %p81
      %p83 = scmp.ne.s32.totalorder %s74, %s75
      %p84 = scmp.eq.s32.totalorder %s22, 0
      %p85 = por %p83, %p84
      %p86 = scmp.ne.s32.totalorder %s74, %s75
      %p87 = scmp.eq.s32.totalorder %s23, 1
      %p88 = por %p86, %p87
      %p90 = scmp.ne.s32.totalorder %s75, %s89
      %p91 = scmp.eq.s32.totalorder %s23, 0
      %p92 = por %p90, %p91
      %s94 = sadd.s32 %s93, 1
      %p97 = scmp.eq.s32.totalorder %s17, 1
      %p98 = scmp.ne.s32.totalorder %s93, %s95
      %p99 = scmp.eq.s32.totalorder %s17, 0
      %p100 = por %p98, %p99
      %p101 = scmp.ne.s32.totalorder %s93, %s95
      %p102 = scmp.eq.s32.totalorder %s22, 1
      %p103 = por %p101, %p102
      %p104 = scmp.ne.s32.totalorder %s95, %s96
      %p105 = scmp.eq.s32.totalorder %s22, 0
      %p106 = por %p104, %p105
      %p107 = scmp.ne.s32.totalorder %s95, %s96
      %p108 = scmp.eq.s32.totalorder %s23, 1
      %p109 = por %p107, %p108
      %p111 = scmp.ne.s32.totalorder %s96, %s110
      %p112 = scmp.eq.s32.totalorder %s23, 0
      %p113 = por %p111, %p112
      %s114 = ssub.s32 %s17, %s24
      %p115 = scmp.eq.s32.totalorder %s114, 0
      %s117 = sadd.s32 %s116, 1
      %s118 = scalar_select %p115, %s116, %s117
      %p121 = pneg %p115
      %p122 = scmp.eq.s32.totalorder %s17, 1
      %p123 = por %p121, %p122
      %p124 = scmp.ne.s32.totalorder %s116, %s119
      %p125 = scmp.eq.s32.totalorder %s17, 0
      %p126 = por %p124, %p125
      %p127 = scmp.ne.s32.totalorder %s116, %s119
      %p128 = scmp.eq.s32.totalorder %s22, 1
      %p129 = por %p127, %p128
      %p130 = scmp.ne.s32.totalorder %s119, %s120
      %p131 = scmp.eq.s32.totalorder %s22, 0
      %p132 = por %p130, %p131
      %p133 = scmp.ne.s32.totalorder %s119, %s120
      %p134 = scmp.eq.s32.totalorder %s23, 1
      %p135 = por %p133, %p134
      %p137 = scmp.ne.s32.totalorder %s120, %s136
      %p138 = scmp.eq.s32.totalorder %s23, 0
      %p139 = por %p137, %p138
      %p140 = scmp.le.s32.totalorder 1, %s17
      %p141 = scmp.lt.s32.totalorder %s17, 3
      %p142 = pnand %p140, %p141
      %p143 = pneg %p142
      // Predicated region
      $region9: #{tpu_custom_call.1} parent=5 // pred_check
        _
      $region10: #{tpu_custom_call.1} parent=5 // pred_check_branch
        %145 = sbr.rel (%p142) target = $region12
      $region11: #{tpu_custom_call.1} parent=5 // pred_region
        %s146 = ssub.s32 %s17, 1
        // Predicated region
        $region13: #{tpu_custom_call.1} parent=11 // pred_check
          %p147 = pneg %p64
        $region14: #{tpu_custom_call.1} parent=11 // pred_check_branch
          %149 = sbr.rel (%p147) target = $region16
        $region15: #{tpu_custom_call.1} parent=11 // pred_region
          %s151 = ssub.s32 512, 512
          %152 = vsyncadd [#allocation6], %s151
          %s153 = sshll.u32 [#allocation5], 4
          %s154 = int_to_ptr.vmem [resolvable:$true] %s153
          %159 = dma.hbm_to_vmem [thread:$0]  %s1, 512, %s154, [#allocation6], 128, 128, 8
        $region16: #{tpu_custom_call.1} parent=11 // pred_fallthru
          _
        // Predicated region
        $region17: #{tpu_custom_call.1} parent=11 // pred_check
          %p160 = pneg %p85
        $region18: #{tpu_custom_call.1} parent=11 // pred_check_branch
          %162 = sbr.rel (%p160) target = $region20
        $region19: #{tpu_custom_call.1} parent=11 // pred_region
          %s164 = ssub.s32 512, 512
          %165 = vsyncadd [#allocation6], %s164
          %s166 = sshll.u32 [#allocation7], 4
          %s167 = int_to_ptr.vmem [resolvable:$true] %s166
          %172 = dma.hbm_to_vmem [thread:$0]  %s2, 512, %s167, [#allocation6], 128, 128, 8
        $region20: #{tpu_custom_call.1} parent=11 // pred_fallthru
          _
        // Predicated region
        $region21: #{tpu_custom_call.1} parent=11 // pred_check
          %p173 = pneg %p106
        $region22: #{tpu_custom_call.1} parent=11 // pred_check_branch
          %175 = sbr.rel (%p173) target = $region24
        $region23: #{tpu_custom_call.1} parent=11 // pred_region
          _
        $region24: #{tpu_custom_call.1} parent=11 // pred_fallthru
          _
      $region12: #{tpu_custom_call.1} parent=5 // pred_fallthru
        _
      %p176 = scmp.lt.s32.totalorder %s17, 2
      // Predicated region
      $region25: #{tpu_custom_call.1} parent=5 // pred_check
        %p177 = pneg %p176
      $region26: #{tpu_custom_call.1} parent=5 // pred_check_branch
        %179 = sbr.rel (%p177) target = $region28
      $region27: #{tpu_custom_call.1} parent=5 // pred_region
        // Predicated region
        $region29: #{tpu_custom_call.1} parent=27 // pred_check
          %p180 = pneg %p37
        $region30: #{tpu_custom_call.1} parent=27 // pred_check_branch
          %182 = sbr.rel (%p180) target = $region32
        $region31: #{tpu_custom_call.1} parent=27 // pred_region
          %s183 = sand.u32 %s27, 1
          %s184 = scalar_lea.sflag [#allocation3], %s183
          %s185 = sand.u32 %s27, 1
          %s186 = smul.addr %s185, 8
          %s187 = scalar_lea.vmem [#allocation2], %s186
          %s189 = ssub.s32 128, 128
          %190 = vsyncadd %s184, %s189
          %s191 = smul.addr %s17, 128
          %s192 = scalar_lea.hbm %s0, %s191
          %s194 = sshll.u32 %s187, 4
          %s195 = int_to_ptr.vmem [resolvable:$true] %s194
          %197 = dma.hbm_to_vmem [thread:$0]  %s192, 128, %s195, %s184
        $region32: #{tpu_custom_call.1} parent=27 // pred_fallthru
          _
      $region28: #{tpu_custom_call.1} parent=5 // pred_fallthru
        _
      %p198 = scmp.le.s32.totalorder 1, %s17
      %p199 = scmp.lt.s32.totalorder %s17, 3
      %p200 = pnand %p198, %p199
      %p201 = pneg %p200
      // Predicated region
      $region33: #{tpu_custom_call.1} parent=5 // pred_check
        _
      $region34: #{tpu_custom_call.1} parent=5 // pred_check_branch
        %203 = sbr.rel (%p200) target = $region36
      $region35: #{tpu_custom_call.1} parent=5 // pred_region
        %s204 = ssub.s32 %s17, 1
        %s205 = sand.u32 %s30, 1
        %s206 = scalar_lea.sflag [#allocation3], %s205
        %s207 = sand.u32 %s30, 1
        %s208 = smul.addr %s207, 8
        %s209 = scalar_lea.vmem [#allocation2], %s208
        // Predicated region
        $region37: #{tpu_custom_call.1} parent=35 // pred_check
          %p210 = pneg %p43
        $region38: #{tpu_custom_call.1} parent=35 // pred_check_branch
          %212 = sbr.rel (%p210) target = $region40
        $region39: #{tpu_custom_call.1} parent=35 // pred_region
          %213 = dma.done %s206, 128
        $region40: #{tpu_custom_call.1} parent=35 // pred_fallthru
          _
        // Predicated region
        $region41: #{tpu_custom_call.1} parent=35 // pred_check
          %p214 = pneg %p64
        $region42: #{tpu_custom_call.1} parent=35 // pred_check_branch
          %216 = sbr.rel (%p214) target = $region44
        $region43: #{tpu_custom_call.1} parent=35 // pred_region
          %217 = dma.done [#allocation6], 512
        $region44: #{tpu_custom_call.1} parent=35 // pred_fallthru
          _
        // Predicated region
        $region45: #{tpu_custom_call.1} parent=35 // pred_check
          %p218 = pneg %p85
        $region46: #{tpu_custom_call.1} parent=35 // pred_check_branch
          %220 = sbr.rel (%p218) target = $region48
        $region47: #{tpu_custom_call.1} parent=35 // pred_region
          %221 = dma.done [#allocation6], 512
        $region48: #{tpu_custom_call.1} parent=35 // pred_fallthru
          _
        %s222 = sand.u32 %s30, 1
        %s223 = scalar_lea.sflag [#allocation3], %s222
        %s224 = sand.u32 %s30, 1
        %s225 = smul.addr %s224, 8
        %s226 = scalar_lea.vmem [#allocation2], %s225
        %p227 = pneg %p43
        %p228 = pneg %p40
        %p229 = pneg %p64
        %p230 = pneg %p61
        %p231 = pneg %p85
        %p232 = pneg %p82
        %p233 = pneg %p106
        %p234 = pneg %p103
        %p235 = pneg %p132
        %p236 = pneg %p129
        %s237 = sand.u32 %s119, 1
        %s238 = scalar_lea.sflag [#allocation4], %s237
        %s239 = sand.u32 %s119, 1
        %s240 = smul.addr %s239, 8
        %s241 = scalar_lea.vmem [#allocation8], %s240
        %v242 = vld [vmem:[%s209] sm:$0xff]
        %vm243 = vcmask 261120
        %v244 = vsel %vm243, %v242, 0.0
        %v245 = vrot.slane %v244, 4
        %v246 = vadd.f32 %v244, %v245
        %v247 = vrot.slane %v246, 2
        %v248 = vadd.f32 %v246, %v247
        %v249 = vrot.slane %v248, 1
        %v250 = vadd.f32 %v248, %v249
        %v251 = vmul.f32 %v250, 0.125
        %v252 = vld [vmem:[#allocation7] sm:$0xff]
        %v253 = vld [vmem:[#allocation7 + $0x8] sm:$0xff]
        %v254 = vld [vmem:[#allocation7 + $0x10] sm:$0xff]
        %v255 = vld [vmem:[#allocation7 + $0x18] sm:$0xff]
        %v256 = vld [vmem:[%s3] sm:$0x1]
        %v258 = vsel %vm243, %v251, 0
        %260 = vmatprep.subr.mxu0 0.0
        %261 = vmatpush1.msra.mxu0 %v252
        %262 = vmatprep.subr.mxu0 0.0
        %263 = vmatpush1.msra.mxu0 %v253
        %264 = vmatprep.subr.mxu0 0.0
        %265 = vmatpush1.msra.mxu0 %v254
        %266 = vmatprep.subr.mxu0 0.0
        %267 = vmatpush1.msra.mxu0 %v255
        %268 = vmatprep.subr.mxu0 0.0
        %269 = vmatpush1.msra.mxu0 0.0
        %270 = vmatprep.subr.mxu0 0.0
        %271 = vmatpush1.msra.mxu0 0.0
        %272 = vmatprep.subr.mxu0 0.0
        %273 = vmatpush1.msra.mxu0 0.0
        %274 = vmatprep.subr.mxu0 0.0
        %275 = vmatpush1.msra.mxu0 0.0
        %276 = vmatprep.subr.mxu0 0.0
        %277 = vmatpush1.msra.mxu0 0.0
        %278 = vmatprep.subr.mxu0 0.0
        %279 = vmatpush1.msra.mxu0 0.0
        %280 = vmatprep.subr.mxu0 0.0
        %281 = vmatpush1.msra.mxu0 0.0
        %282 = vmatprep.subr.mxu0 0.0
        %283 = vmatpush1.msra.mxu0 0.0
        %284 = vmatprep.subr.mxu0 0.0
        %285 = vmatpush1.msra.mxu0 0.0
        %286 = vmatprep.subr.mxu0 0.0
        %287 = vmatpush1.msra.mxu0 0.0
        %288 = vmatprep.subr.mxu0 0.0
        %289 = vmatpush1.msra.mxu0 0.0
        %290 = vmatprep.subr.mxu0 0.0
        %291 = vmatpush1.msra.mxu0 0.0
        %292 = vmatprep.subr.mxu0 0.0
        %293 = vmatpush1.msra.mxu0 0.0
        %294 = vmatprep.subr.mxu0 0.0
        %295 = vmatpush1.msra.mxu0 0.0
        %296 = vmatprep.subr.mxu0 0.0
        %297 = vmatpush1.msra.mxu0 0.0
        %298 = vmatprep.subr.mxu0 0.0
        %299 = vmatpush1.msra.mxu0 0.0
        %300 = vmatprep.subr.mxu0 0.0
        %301 = vmatpush1.msra.mxu0 0.0
        %302 = vmatprep.subr.mxu0 0.0
        %303 = vmatpush1.msra.mxu0 0.0
        %304 = vmatprep.subr.mxu0 0.0
        %305 = vmatpush1.msra.mxu0 0.0
        %306 = vmatprep.subr.mxu0 0.0
        %307 = vmatpush1.msra.mxu0 0.0
        %308 = vmatprep.subr.mxu0 0.0
        %309 = vmatpush1.msra.mxu0 0.0
        %310 = vmatprep.subr.mxu0 0.0
        %311 = vmatpush1.msra.mxu0 0.0
        %312 = vmatprep.subr.mxu0 0.0
        %313 = vmatpush1.msra.mxu0 0.0
        %314 = vmatprep.subr.mxu0 0.0
        %315 = vmatpush1.msra.mxu0 0.0
        %316 = vmatprep.subr.mxu0 0.0
        %317 = vmatpush1.msra.mxu0 0.0
        %318 = vmatprep.subr.mxu0 0.0
        %319 = vmatpush1.msra.mxu0 0.0
        %320 = vmatprep.subr.mxu0 0.0
        %321 = vmatpush1.msra.mxu0 0.0
        %322 = vmatprep.subr.mxu0 0.0
        %323 = vmatpush1.msra.mxu0 0.0
        %324 = vmatprep.mubr.f32.mxu0 0.0
        %325 = vmatmul.mubr.f32.gmra.mrb[0].mxu0 %v258
        %v326 = vpop.f32.mrb[0].mxu0
        %v327 = vadd.f32 %v256, %v326
        %v328 = vpop.f32.mrb[0].mxu0
        %329 = vdwg.mxu0
        %v330 = vld [vmem:[#allocation5] sm:$0xff]
        %v331 = vld [vmem:[#allocation5 + $0x8] sm:$0xff]
        %v332 = vld [vmem:[#allocation5 + $0x10] sm:$0xff]
        %v333 = vld [vmem:[#allocation5 + $0x18] sm:$0xff]
        %v335 = vsel %vm243, %v242, 0
        %337 = vmatprep.subr.mxu0 0.0
        %338 = vmatpush1.msra.mxu0 %v330
        %339 = vmatprep.subr.mxu0 0.0
        %340 = vmatpush1.msra.mxu0 %v331
        %341 = vmatprep.subr.mxu0 0.0
        %342 = vmatpush1.msra.mxu0 %v332
        %343 = vmatprep.subr.mxu0 0.0
        %344 = vmatpush1.msra.mxu0 %v333
        %345 = vmatprep.subr.mxu0 0.0
        %346 = vmatpush1.msra.mxu0 0.0
        %347 = vmatprep.subr.mxu0 0.0
        %348 = vmatpush1.msra.mxu0 0.0
        %349 = vmatprep.subr.mxu0 0.0
        %350 = vmatpush1.msra.mxu0 0.0
        %351 = vmatprep.subr.mxu0 0.0
        %352 = vmatpush1.msra.mxu0 0.0
        %353 = vmatprep.subr.mxu0 0.0
        %354 = vmatpush1.msra.mxu0 0.0
        %355 = vmatprep.subr.mxu0 0.0
        %356 = vmatpush1.msra.mxu0 0.0
        %357 = vmatprep.subr.mxu0 0.0
        %358 = vmatpush1.msra.mxu0 0.0
        %359 = vmatprep.subr.mxu0 0.0
        %360 = vmatpush1.msra.mxu0 0.0
        %361 = vmatprep.subr.mxu0 0.0
        %362 = vmatpush1.msra.mxu0 0.0
        %363 = vmatprep.subr.mxu0 0.0
        %364 = vmatpush1.msra.mxu0 0.0
        %365 = vmatprep.subr.mxu0 0.0
        %366 = vmatpush1.msra.mxu0 0.0
        %367 = vmatprep.subr.mxu0 0.0
        %368 = vmatpush1.msra.mxu0 0.0
        %369 = vmatprep.subr.mxu0 0.0
        %370 = vmatpush1.msra.mxu0 0.0
        %371 = vmatprep.subr.mxu0 0.0
        %372 = vmatpush1.msra.mxu0 0.0
        %373 = vmatprep.subr.mxu0 0.0
        %374 = vmatpush1.msra.mxu0 0.0
        %375 = vmatprep.subr.mxu0 0.0
        %376 = vmatpush1.msra.mxu0 0.0
        %377 = vmatprep.subr.mxu0 0.0
        %378 = vmatpush1.msra.mxu0 0.0
        %379 = vmatprep.subr.mxu0 0.0
        %380 = vmatpush1.msra.mxu0 0.0
        %381 = vmatprep.subr.mxu0 0.0
        %382 = vmatpush1.msra.mxu0 0.0
        %383 = vmatprep.subr.mxu0 0.0
        %384 = vmatpush1.msra.mxu0 0.0
        %385 = vmatprep.subr.mxu0 0.0
        %386 = vmatpush1.msra.mxu0 0.0
        %387 = vmatprep.subr.mxu0 0.0
        %388 = vmatpush1.msra.mxu0 0.0
        %389 = vmatprep.subr.mxu0 0.0
        %390 = vmatpush1.msra.mxu0 0.0
        %391 = vmatprep.subr.mxu0 0.0
        %392 = vmatpush1.msra.mxu0 0.0
        %393 = vmatprep.subr.mxu0 0.0
        %394 = vmatpush1.msra.mxu0 0.0
        %395 = vmatprep.subr.mxu0 0.0
        %396 = vmatpush1.msra.mxu0 0.0
        %397 = vmatprep.subr.mxu0 0.0
        %398 = vmatpush1.msra.mxu0 0.0
        %399 = vmatprep.subr.mxu0 0.0
        %400 = vmatpush1.msra.mxu0 0.0
        %401 = vmatprep.mubr.f32.mxu0 0.0
        %402 = vmatmul.mubr.f32.gmra.mrb[0].mxu0 %v335
        %v403 = vpop.f32.mrb[0].mxu0
        %v404 = vadd.f32 0.0, %v403
        %v405 = vpop.f32.mrb[0].mxu0
        %406 = vdwg.mxu0
        %v407 = vlaneseq
        %v408 = vshrl.u32 %v407, 7
        %v409 = vsub.s32 0, %v408
        %v410 = vrot.slane %v327, %v409
        %v411 = vadd.f32 %v404, %v410
        %412 = vst.msk [vmem:[%s241] sm:$0xff] %vm243, %v411
        %s413 = sand.u32 %s119, 1
        %s414 = scalar_lea.sflag [#allocation4], %s413
        %s415 = sand.u32 %s119, 1
        %s416 = smul.addr %s415, 8
        %s417 = scalar_lea.vmem [#allocation8], %s416
        // Predicated region
        $region49: #{tpu_custom_call.1} parent=35 // pred_check
          %p418 = pneg %p129
        $region50: #{tpu_custom_call.1} parent=35 // pred_check_branch
          %420 = sbr.rel (%p418) target = $region52
        $region51: #{tpu_custom_call.1} parent=35 // pred_region
          %s422 = ssub.s32 128, 128
          %423 = vsyncadd %s414, %s422
          %s424 = smul.addr %s22, 128
          %s425 = scalar_lea.hbm %s4, %s424
          %s427 = sshll.u32 %s417, 4
          %s428 = int_to_ptr.vmem [resolvable:$true] %s427
          %430 = dma.vmem_to_hbm [thread:$0]  %s428, 128, %s425, %s414
        $region52: #{tpu_custom_call.1} parent=35 // pred_fallthru
          _
      $region36: #{tpu_custom_call.1} parent=5 // pred_fallthru
        _
      %p431 = scmp.le.s32.totalorder 2, %s17
      // Predicated region
      $region53: #{tpu_custom_call.1} parent=5 // pred_check
        %p432 = pneg %p431
      $region54: #{tpu_custom_call.1} parent=5 // pred_check_branch
        %434 = sbr.rel (%p432) target = $region56
      $region55: #{tpu_custom_call.1} parent=5 // pred_region
        %s435 = ssub.s32 %s17, 2
        // Predicated region
        $region57: #{tpu_custom_call.1} parent=55 // pred_check
          %p436 = pneg %p135
        $region58: #{tpu_custom_call.1} parent=55 // pred_check_branch
          %438 = sbr.rel (%p436) target = $region60
        $region59: #{tpu_custom_call.1} parent=55 // pred_region
          %s439 = sand.u32 %s120, 1
          %s440 = scalar_lea.sflag [#allocation4], %s439
          %s441 = sand.u32 %s120, 1
          %s442 = smul.addr %s441, 8
          %s443 = scalar_lea.vmem [#allocation8], %s442
          %444 = dma.done %s440, 128
        $region60: #{tpu_custom_call.1} parent=55 // pred_fallthru
          _
      $region56: #{tpu_custom_call.1} parent=5 // pred_fallthru
        _
    $region6: #{tpu_custom_call.1} parent=1 // loop_footer
      %s21 = sadd.s32 1, %s17
    $region7: #{tpu_custom_call.1} parent=1 // loop_footer_branch
      %16 = sbr.rel target = $region3
    $region8: #{tpu_custom_call.1} parent=1 // loop_exit
      _
    %445 = vsyncpa [#allocation3], 1
    %s446 = scalar_lea.sflag [#allocation3], 1
    %447 = vsyncpa %s446, 1
    %448 = vsyncpa [#allocation6], 1
    %449 = vsyncpa [#allocation4], 1
    %s450 = scalar_lea.sflag [#allocation4], 1
    %451 = vsyncpa %s450, 1

</llo_original>
